<compile_context>
chip_gen: v5e
topology: v5e:2x2
jax: 0.10.0
libtpu: 0.0.40
codegen_flags: <defaults>
</compile_context>

<pallas_src>
import jax
import jax.numpy as jnp
import numpy as np
from jax.experimental import pallas as pl
from jax.experimental.pallas import tpu as pltpu

# ----------------------------- config (args.*) -------------------------------
B = 2                  # batch (len(sample_id))
L = 32                 # gan_wrapper.latent_dim
C, H, W_IMG = 4, 16, 16
P = C * H * W_IMG      # flattened image size
N_STEPS = 4            # args.model.n_steps
STEP_SIZE = 0.01       # args.model.step_size
W_IMG_ENERGY = 1.0     # weight of "ImgEnergy"
W_LATENT_ENERGY = 0.5  # weight of "LatentEnergy"
MAX_SAMPLE_SIZE = 16   # fixed_z buffer rows

HALF_STEP = STEP_SIZE / 2.0
SQRT_STEP = float(np.sqrt(STEP_SIZE))

_COST = pl.CostEstimate(
    flops=2 * B * L * L * (N_STEPS + 1) + 2 * B * L * P + 4 * B * P + 6 * B * L,
    transcendentals=0,
    bytes_accessed=(B * L * 4 + L * L * 4 + N_STEPS * L * L * 4 + L * 4
                    + N_STEPS * B * L * 4 + L * P * 2 + P * 4        # inputs
                    + B * L * 4 + B * P * 4 + 3 * B * 4))            # outputs


# ------------------------------- Pallas kernel --------------------------------
def _langevin_kernel(z0_ref, m_ref, tpows_ref, c_ref, noise_ref, wg_ref, bg_ref,
                     z_ref, img_ref, wl_ref, l_img_ref, l_lat_ref):
    c = c_ref[...]                                        # (1, L) f32

    # Folded affine recurrence: z_N = z0 @ T^N + sum_k b_k @ T^(N-1-k),
    # with b_k = sqrt(step)*noise_k - (step/2)*c.  The N+1 small matmuls are
    # independent (no dependent MXU push->pop chain); loop is fully unrolled.
    z = jnp.dot(z0_ref[...], m_ref[...], preferred_element_type=jnp.float32)
    for k in range(N_STEPS):
        b_k = SQRT_STEP * noise_ref[k] - HALF_STEP * c    # (B, L) f32, VPU
        z = z + jnp.dot(b_k, tpows_ref[k], preferred_element_type=jnp.float32)
    z_ref[...] = z

    # Generator forward once, at the final z: bf16 weights, f32 accumulation.
    img = (jnp.dot(z.astype(jnp.bfloat16), wg_ref[...],
                   preferred_element_type=jnp.float32) + bg_ref[...])
    img_ref[...] = img                                    # lane-dense (B, P)

    # Energies fused in-kernel (img / z already live in vregs).
    l_img = jnp.mean(img * img, axis=1, keepdims=True)    # (B, 1) ImgEnergy
    l_lat = jnp.mean(z * z, axis=1, keepdims=True)        # (B, 1) LatentEnergy
    l_img_ref[...] = l_img
    l_lat_ref[...] = l_lat
    wl_ref[...] = W_IMG_ENERGY * l_img + W_LATENT_ENERGY * l_lat


# ----------------------- load-time (one-off) precompute ------------------------
def precompute_operators(wg, bg):
    """Checkpoint-load-time precompute of the folded Langevin operators (f64)."""
    wg64 = np.asarray(wg, dtype=np.float64)
    bg64 = np.asarray(bg, dtype=np.float64)
    c1 = 2.0 * W_IMG_ENERGY / P
    c2 = 2.0 * W_LATENT_ENERGY / L
    a = c1 * (wg64 @ wg64.T) + c2 * np.eye(L)             # grad operator (L, L)
    c = c1 * (bg64 @ wg64.T)                              # grad bias     (1, L)
    t = np.eye(L) - HALF_STEP * a                         # per-step operator
    pows = [np.eye(L)]
    for _ in range(N_STEPS):
        pows.append(pows[-1] @ t)                         # pows[j] = T^j
    m = pows[N_STEPS]                                     # T^N
    t_pows = np.stack([pows[N_STEPS - 1 - k] for k in range(N_STEPS)], axis=0)
    return (jnp.asarray(m, jnp.float32),
            jnp.asarray(t_pows, jnp.float32),
            jnp.asarray(c, jnp.float32),
            jnp.asarray(wg, jnp.float32).astype(jnp.bfloat16),
            jnp.asarray(bg, jnp.float32))


# --------------------------------- wrapper ------------------------------------
@jax.jit
def langevin_forward(sample_id, fixed_z, m, t_pows, c, wg_bf16, bg, noise):
    # eval-mode get_z_gaussian: gather rows of the fixed latent table (glue)
    z0 = fixed_z[sample_id]                               # (B, L)

    vmem = pl.BlockSpec(memory_space=pltpu.MemorySpace.VMEM)
    z_f, img_flat, wl, l_img, l_lat = pl.pallas_call(
        _langevin_kernel,
        out_shape=(
            jax.ShapeDtypeStruct((B, L), jnp.float32),    # final z
            jax.ShapeDtypeStruct((B, P), jnp.float32),    # img (flat, lane-dense)
            jax.ShapeDtypeStruct((B, 1), jnp.float32),    # weighted_loss
            jax.ShapeDtypeStruct((B, 1), jnp.float32),    # ImgEnergy
            jax.ShapeDtypeStruct((B, 1), jnp.float32),    # LatentEnergy
        ),
        in_specs=[vmem] * 7,
        out_specs=(vmem,) * 5,
        cost_estimate=_COST,
    )(z0, m, t_pows, c, noise, wg_bf16, bg)

    img = img_flat.reshape(B, C, H, W_IMG)                # NCHW
    losses = {"ImgEnergy": l_img[:, 0], "LatentEnergy": l_lat[:, 0]}
    return img, wl[:, 0], losses, z_f


# ------------------------------ pure-numpy ref ---------------------------------
def _reference(z0, wg, bg, noise):
    z = z0.astype(np.float32).copy()
    for s in range(N_STEPS):
        img = z @ wg + bg
        grad = (2.0 * W_IMG_ENERGY / P) * (img @ wg.T) + (2.0 * W_LATENT_ENERGY / L) * z
        z = z - HALF_STEP * grad + noise[s] * SQRT_STEP
    img = z @ wg + bg
    l1 = np.mean(img * img, axis=1)
    l2 = np.mean(z * z, axis=1)
    wl = W_IMG_ENERGY * l1 + W_LATENT_ENERGY * l2
    return img.reshape(B, C, H, W_IMG), wl, l1, l2, z


if __name__ == "__main__":
    key = jax.random.PRNGKey(0)
    k1, k2, k3, k4 = jax.random.split(key, 4)
    # deterministic synthetic "checkpoint"
    fixed_z = jax.random.normal(k1, (MAX_SAMPLE_SIZE, L), jnp.float32)
    wg = jax.random.normal(k2, (L, P), jnp.float32) * 0.05
    bg = jax.random.normal(k3, (1, P), jnp.float32) * 0.01
    noise = jax.random.normal(k4, (N_STEPS, B, L), jnp.float32)
    sample_id = jnp.array([3, 7], dtype=jnp.int32)

    # One-off load-time precompute (outside the per-call jitted path).
    m, t_pows, c, wg_bf16, bg_f32 = precompute_operators(wg, bg)

    img, wl, losses, z_f = langevin_forward(
        sample_id, fixed_z, m, t_pows, c, wg_bf16, bg_f32, noise)
    jax.block_until_ready((img, wl, losses, z_f))

    ref_img, ref_wl, ref_l1, ref_l2, ref_z = _reference(
        np.asarray(fixed_z)[np.asarray(sample_id)],
        np.asarray(wg), np.asarray(bg), np.asarray(noise))

    assert img.shape == (B, C, H, W_IMG) and wl.shape == (B,)
    # z path is pure f32 (f64 load-time precompute): tight tolerance.
    assert np.allclose(np.asarray(z_f), ref_z, rtol=1e-3, atol=1e-3)
    assert np.allclose(np.asarray(losses["LatentEnergy"]), ref_l2, rtol=1e-3, atol=1e-3)
    # img path uses bf16 MXU inputs with f32 accumulation: slightly looser.
    assert np.allclose(np.asarray(img), ref_img, rtol=1e-2, atol=1e-2)
    assert np.allclose(np.asarray(losses["ImgEnergy"]), ref_l1, rtol=1e-2, atol=1e-2)
    assert np.allclose(np.asarray(wl), ref_wl, rtol=1e-2, atol=1e-2)
    print("KERNEL_OK")
</pallas_src>

<mosaic_0001>
module attributes {stable_mosaic.version = 11 : i64} {
  func.func @_langevin_kernel(%arg0: memref<2x32xf32, #tpu.memory_space<vmem>>, %arg1: memref<32x32xf32, #tpu.memory_space<vmem>>, %arg2: memref<4x32x32xf32, #tpu.memory_space<vmem>>, %arg3: memref<1x32xf32, #tpu.memory_space<vmem>>, %arg4: memref<4x2x32xf32, #tpu.memory_space<vmem>>, %arg5: memref<32x1024xbf16, #tpu.memory_space<vmem>>, %arg6: memref<1x1024xf32, #tpu.memory_space<vmem>>, %arg7: memref<2x32xf32, #tpu.memory_space<vmem>>, %arg8: memref<2x1024xf32, #tpu.memory_space<vmem>>, %arg9: memref<2x1xf32, #tpu.memory_space<vmem>>, %arg10: memref<2x1xf32, #tpu.memory_space<vmem>>, %arg11: memref<2x1xf32, #tpu.memory_space<vmem>>) attributes {dimension_semantics = [], scalar_prefetch = 0 : i64, scratch_operands = 0 : i64, tpu.core_type = #tpu.core_type<tc>} {
    %c0 = arith.constant 0 : index
    %c0_0 = arith.constant 0 : index
    %0 = vector.load %arg3[%c0, %c0_0] : memref<1x32xf32, #tpu.memory_space<vmem>>, vector<1x32xf32>
    %c0_1 = arith.constant 0 : index
    %c0_2 = arith.constant 0 : index
    %1 = vector.load %arg0[%c0_1, %c0_2] : memref<2x32xf32, #tpu.memory_space<vmem>>, vector<2x32xf32>
    %c0_3 = arith.constant 0 : index
    %c0_4 = arith.constant 0 : index
    %2 = vector.load %arg1[%c0_3, %c0_4] : memref<32x32xf32, #tpu.memory_space<vmem>>, vector<32x32xf32>
    %cst = arith.constant dense<0.000000e+00> : vector<2x32xf32>
    %3 = tpu.matmul %1, %2, %cst {dimension_numbers = #tpu.dot_dimension_numbers<[1], [0], [0], [1], [0, 0, 1, 1], [], []>} : vector<2x32xf32>, vector<32x32xf32>, vector<2x32xf32> -> vector<2x32xf32>
    %c0_5 = arith.constant 0 : index
    %c0_6 = arith.constant 0 : index
    %c0_7 = arith.constant 0 : index
    %4 = vector.load %arg4[%c0_5, %c0_6, %c0_7] : memref<4x2x32xf32, #tpu.memory_space<vmem>>, vector<1x2x32xf32>
    %5 = vector.shape_cast %4 : vector<1x2x32xf32> to vector<2x32xf32>
    %cst_8 = arith.constant 1.000000e-01 : f32
    %6 = vector.broadcast %cst_8 : f32 to vector<2x32xf32>
    %7 = arith.mulf %6, %5 : vector<2x32xf32>
    %cst_9 = arith.constant 5.000000e-03 : f32
    %8 = vector.broadcast %cst_9 : f32 to vector<1x32xf32>
    %9 = arith.mulf %8, %0 : vector<1x32xf32>
    %10 = vector.broadcast %9 : vector<1x32xf32> to vector<2x32xf32>
    %11 = arith.subf %7, %10 : vector<2x32xf32>
    %c0_10 = arith.constant 0 : index
    %c0_11 = arith.constant 0 : index
    %c0_12 = arith.constant 0 : index
    %12 = vector.load %arg2[%c0_10, %c0_11, %c0_12] : memref<4x32x32xf32, #tpu.memory_space<vmem>>, vector<1x32x32xf32>
    %13 = vector.shape_cast %12 : vector<1x32x32xf32> to vector<32x32xf32>
    %cst_13 = arith.constant dense<0.000000e+00> : vector<2x32xf32>
    %14 = tpu.matmul %11, %13, %cst_13 {dimension_numbers = #tpu.dot_dimension_numbers<[1], [0], [0], [1], [0, 0, 1, 1], [], []>} : vector<2x32xf32>, vector<32x32xf32>, vector<2x32xf32> -> vector<2x32xf32>
    %15 = arith.addf %3, %14 : vector<2x32xf32>
    %c1 = arith.constant 1 : index
    %c0_14 = arith.constant 0 : index
    %c0_15 = arith.constant 0 : index
    %16 = vector.load %arg4[%c1, %c0_14, %c0_15] : memref<4x2x32xf32, #tpu.memory_space<vmem>>, vector<1x2x32xf32>
    %17 = vector.shape_cast %16 : vector<1x2x32xf32> to vector<2x32xf32>
    %cst_16 = arith.constant 1.000000e-01 : f32
    %18 = vector.broadcast %cst_16 : f32 to vector<2x32xf32>
    %19 = arith.mulf %18, %17 : vector<2x32xf32>
    %cst_17 = arith.constant 5.000000e-03 : f32
    %20 = vector.broadcast %cst_17 : f32 to vector<1x32xf32>
    %21 = arith.mulf %20, %0 : vector<1x32xf32>
    %22 = vector.broadcast %21 : vector<1x32xf32> to vector<2x32xf32>
    %23 = arith.subf %19, %22 : vector<2x32xf32>
    %c1_18 = arith.constant 1 : index
    %c0_19 = arith.constant 0 : index
    %c0_20 = arith.constant 0 : index
    %24 = vector.load %arg2[%c1_18, %c0_19, %c0_20] : memref<4x32x32xf32, #tpu.memory_space<vmem>>, vector<1x32x32xf32>
    %25 = vector.shape_cast %24 : vector<1x32x32xf32> to vector<32x32xf32>
    %cst_21 = arith.constant dense<0.000000e+00> : vector<2x32xf32>
    %26 = tpu.matmul %23, %25, %cst_21 {dimension_numbers = #tpu.dot_dimension_numbers<[1], [0], [0], [1], [0, 0, 1, 1], [], []>} : vector<2x32xf32>, vector<32x32xf32>, vector<2x32xf32> -> vector<2x32xf32>
    %27 = arith.addf %15, %26 : vector<2x32xf32>
    %c2 = arith.constant 2 : index
    %c0_22 = arith.constant 0 : index
    %c0_23 = arith.constant 0 : index
    %28 = vector.load %arg4[%c2, %c0_22, %c0_23] : memref<4x2x32xf32, #tpu.memory_space<vmem>>, vector<1x2x32xf32>
    %29 = vector.shape_cast %28 : vector<1x2x32xf32> to vector<2x32xf32>
    %cst_24 = arith.constant 1.000000e-01 : f32
    %30 = vector.broadcast %cst_24 : f32 to vector<2x32xf32>
    %31 = arith.mulf %30, %29 : vector<2x32xf32>
    %cst_25 = arith.constant 5.000000e-03 : f32
    %32 = vector.broadcast %cst_25 : f32 to vector<1x32xf32>
    %33 = arith.mulf %32, %0 : vector<1x32xf32>
    %34 = vector.broadcast %33 : vector<1x32xf32> to vector<2x32xf32>
    %35 = arith.subf %31, %34 : vector<2x32xf32>
    %c2_26 = arith.constant 2 : index
    %c0_27 = arith.constant 0 : index
    %c0_28 = arith.constant 0 : index
    %36 = vector.load %arg2[%c2_26, %c0_27, %c0_28] : memref<4x32x32xf32, #tpu.memory_space<vmem>>, vector<1x32x32xf32>
    %37 = vector.shape_cast %36 : vector<1x32x32xf32> to vector<32x32xf32>
    %cst_29 = arith.constant dense<0.000000e+00> : vector<2x32xf32>
    %38 = tpu.matmul %35, %37, %cst_29 {dimension_numbers = #tpu.dot_dimension_numbers<[1], [0], [0], [1], [0, 0, 1, 1], [], []>} : vector<2x32xf32>, vector<32x32xf32>, vector<2x32xf32> -> vector<2x32xf32>
    %39 = arith.addf %27, %38 : vector<2x32xf32>
    %c3 = arith.constant 3 : index
    %c0_30 = arith.constant 0 : index
    %c0_31 = arith.constant 0 : index
    %40 = vector.load %arg4[%c3, %c0_30, %c0_31] : memref<4x2x32xf32, #tpu.memory_space<vmem>>, vector<1x2x32xf32>
    %41 = vector.shape_cast %40 : vector<1x2x32xf32> to vector<2x32xf32>
    %cst_32 = arith.constant 1.000000e-01 : f32
    %42 = vector.broadcast %cst_32 : f32 to vector<2x32xf32>
    %43 = arith.mulf %42, %41 : vector<2x32xf32>
    %cst_33 = arith.constant 5.000000e-03 : f32
    %44 = vector.broadcast %cst_33 : f32 to vector<1x32xf32>
    %45 = arith.mulf %44, %0 : vector<1x32xf32>
    %46 = vector.broadcast %45 : vector<1x32xf32> to vector<2x32xf32>
    %47 = arith.subf %43, %46 : vector<2x32xf32>
    %c3_34 = arith.constant 3 : index
    %c0_35 = arith.constant 0 : index
    %c0_36 = arith.constant 0 : index
    %48 = vector.load %arg2[%c3_34, %c0_35, %c0_36] : memref<4x32x32xf32, #tpu.memory_space<vmem>>, vector<1x32x32xf32>
    %49 = vector.shape_cast %48 : vector<1x32x32xf32> to vector<32x32xf32>
    %cst_37 = arith.constant dense<0.000000e+00> : vector<2x32xf32>
    %50 = tpu.matmul %47, %49, %cst_37 {dimension_numbers = #tpu.dot_dimension_numbers<[1], [0], [0], [1], [0, 0, 1, 1], [], []>} : vector<2x32xf32>, vector<32x32xf32>, vector<2x32xf32> -> vector<2x32xf32>
    %51 = arith.addf %39, %50 : vector<2x32xf32>
    %c0_38 = arith.constant 0 : index
    %c0_39 = arith.constant 0 : index
    %52 = vector.load %arg7[%c0_38, %c0_39] : memref<2x32xf32, #tpu.memory_space<vmem>>, vector<2x32xf32>
    tpu.vector_store %arg7[%c0_38, %c0_39], %51 {strides = array<i32>} : memref<2x32xf32, #tpu.memory_space<vmem>>, vector<2x32xf32>,
    %53 = arith.truncf %51 : vector<2x32xf32> to vector<2x32xbf16>
    %c0_40 = arith.constant 0 : index
    %c0_41 = arith.constant 0 : index
    %54 = vector.load %arg5[%c0_40, %c0_41] : memref<32x1024xbf16, #tpu.memory_space<vmem>>, vector<32x1024xbf16>
    %cst_42 = arith.constant dense<0.000000e+00> : vector<2x1024xf32>
    %55 = tpu.matmul %53, %54, %cst_42 {dimension_numbers = #tpu.dot_dimension_numbers<[1], [0], [0], [1], [0, 0, 1, 1], [], []>} : vector<2x32xbf16>, vector<32x1024xbf16>, vector<2x1024xf32> -> vector<2x1024xf32>
    %c0_43 = arith.constant 0 : index
    %c0_44 = arith.constant 0 : index
    %56 = vector.load %arg6[%c0_43, %c0_44] : memref<1x1024xf32, #tpu.memory_space<vmem>>, vector<1x1024xf32>
    %57 = vector.broadcast %56 : vector<1x1024xf32> to vector<2x1024xf32>
    %58 = arith.addf %55, %57 : vector<2x1024xf32>
    %c0_45 = arith.constant 0 : index
    %c0_46 = arith.constant 0 : index
    %59 = vector.load %arg8[%c0_45, %c0_46] : memref<2x1024xf32, #tpu.memory_space<vmem>>, vector<2x1024xf32>
    tpu.vector_store %arg8[%c0_45, %c0_46], %58 {strides = array<i32>} : memref<2x1024xf32, #tpu.memory_space<vmem>>, vector<2x1024xf32>,
    %60 = arith.mulf %58, %58 : vector<2x1024xf32>
    %cst_47 = arith.constant dense<0.000000e+00> : vector<2xf32>
    %61 = vector.multi_reduction <add>, %60, %cst_47 [1] : vector<2x1024xf32> to vector<2xf32>
    %62 = vector.shape_cast %61 : vector<2xf32> to vector<2x1xf32>
    %cst_48 = arith.constant 1.024000e+03 : f32
    %63 = vector.broadcast %cst_48 : f32 to vector<2x1xf32>
    %64 = arith.divf %62, %63 : vector<2x1xf32>
    %65 = arith.mulf %51, %51 : vector<2x32xf32>
    %cst_49 = arith.constant dense<0.000000e+00> : vector<2xf32>
    %66 = vector.multi_reduction <add>, %65, %cst_49 [1] : vector<2x32xf32> to vector<2xf32>
    %67 = vector.shape_cast %66 : vector<2xf32> to vector<2x1xf32>
    %cst_50 = arith.constant 3.200000e+01 : f32
    %68 = vector.broadcast %cst_50 : f32 to vector<2x1xf32>
    %69 = arith.divf %67, %68 : vector<2x1xf32>
    %c0_51 = arith.constant 0 : index
    %c0_52 = arith.constant 0 : index
    %70 = vector.load %arg10[%c0_51, %c0_52] : memref<2x1xf32, #tpu.memory_space<vmem>>, vector<2x1xf32>
    tpu.vector_store %arg10[%c0_51, %c0_52], %64 {strides = array<i32>} : memref<2x1xf32, #tpu.memory_space<vmem>>, vector<2x1xf32>,
    %c0_53 = arith.constant 0 : index
    %c0_54 = arith.constant 0 : index
    %71 = vector.load %arg11[%c0_53, %c0_54] : memref<2x1xf32, #tpu.memory_space<vmem>>, vector<2x1xf32>
    tpu.vector_store %arg11[%c0_53, %c0_54], %69 {strides = array<i32>} : memref<2x1xf32, #tpu.memory_space<vmem>>, vector<2x1xf32>,
    %cst_55 = arith.constant 1.000000e+00 : f32
    %72 = vector.broadcast %cst_55 : f32 to vector<2x1xf32>
    %73 = arith.mulf %72, %64 : vector<2x1xf32>
    %cst_56 = arith.constant 5.000000e-01 : f32
    %74 = vector.broadcast %cst_56 : f32 to vector<2x1xf32>
    %75 = arith.mulf %74, %69 : vector<2x1xf32>
    %76 = arith.addf %73, %75 : vector<2x1xf32>
    %c0_57 = arith.constant 0 : index
    %c0_58 = arith.constant 0 : index
    %77 = vector.load %arg9[%c0_57, %c0_58] : memref<2x1xf32, #tpu.memory_space<vmem>>, vector<2x1xf32>
    tpu.vector_store %arg9[%c0_57, %c0_58], %76 {strides = array<i32>} : memref<2x1xf32, #tpu.memory_space<vmem>>, vector<2x1xf32>,
    return
  }
}

</mosaic_0001>

<llo_original>
// kernel: langevin_forward.1
$region0: #{langevin_forward.1}
  #allocation0 [shape = 'u32[]', space=smem, size = 0x4, offset = 0x4, fixed_abs, tag = 'smem constant byte address 0x4 - core index']
  #allocation1 [shape = 'u32[72,128]{1,0:T(1,128)}', space=vmem, size = 0x9000, scoped, tag = 'internal scratch']
  %s0 = inlined_call_operand.vmem [shape: f32[2,32], index: 0, kind: input, shape index: {}]
  %s1 = inlined_call_operand.hbm [shape: f32[32,32], index: 1, kind: input, shape index: {}]
  %s2 = inlined_call_operand.hbm [shape: f32[4,32,32], index: 2, kind: input, shape index: {}]
  %s3 = inlined_call_operand.vmem [shape: f32[1,32], index: 3, kind: input, shape index: {}]
  %s4 = inlined_call_operand.vmem [shape: f32[4,2,32], index: 4, kind: input, shape index: {}]
  %s5 = inlined_call_operand.hbm [shape: bf16[32,1024], index: 5, kind: input, shape index: {}]
  %s6 = inlined_call_operand.vmem [shape: f32[1,1024], index: 6, kind: input, shape index: {}]
  %s7 = inlined_call_operand.hbm [shape: f32[2,32], index: 7, kind: output, shape index: {0}]
  %s8 = inlined_call_operand.vmem [shape: f32[2,1024], index: 8, kind: output, shape index: {1}]
  %s9 = inlined_call_operand.vmem [shape: f32[2,1], index: 9, kind: output, shape index: {2}]
  %s10 = inlined_call_operand.vmem [shape: f32[2,1], index: 10, kind: output, shape index: {3}]
  %s11 = inlined_call_operand.vmem [shape: f32[2,1], index: 11, kind: output, shape index: {4}]
  %12 = xla_tuple %s7, %s8, %s9, %s10, %s11
  %s13 = sld [smem:[#allocation0]]
  $region82: #{langevin_forward.1} parent=0
    _
  %s15 = ssub.s32 1, %s13
  %s16 = scalar_select 0, %s15, %s13
  $region1: #{langevin_forward.1} parent=0
    #allocation2 [shape = 'u8[16384]{0}', space=vmem, size = 0x4000, scoped, tag = 'input window, operand 1, single buffered']
    #allocation3 [shape = 's32[1]{0}', space=sflag, size = 0x4, scoped, tag = 'scoped memory for langevin_forward.1']
    #allocation4 [shape = 's32[1]{0}', space=sflag, size = 0x4, scoped, tag = 'scoped memory for langevin_forward.1']
    #allocation5 [shape = 'u8[65536]{0}', space=vmem, size = 0x10000, scoped, tag = 'input window, operand 2, single buffered']
    #allocation6 [shape = 's32[1]{0}', space=sflag, size = 0x4, scoped, tag = 'scoped memory for langevin_forward.1']
    #allocation7 [shape = 'u8[65536]{0}', space=vmem, size = 0x10000, scoped, tag = 'input window, operand 5, single buffered']
    #allocation8 [shape = 'u8[1024]{0}', space=vmem, size = 0x400, scoped, tag = 'output window, operand 0, single buffered']
    %17 = vsyncpa [#allocation3], 0
    %18 = vsyncpa [#allocation6], 0
    %19 = vsyncpa [#allocation4], 0
    // Predicated region
    $region2: #{langevin_forward.1} parent=1 // pred_check
      _
    $region3: #{langevin_forward.1} parent=1 // pred_check_branch
      %21 = sbr.rel (0) target = $region5
    $region4: #{langevin_forward.1} parent=1 // pred_region
      _
    $region5: #{langevin_forward.1} parent=1 // pred_fallthru
      _
    // Predicated region
    $region6: #{langevin_forward.1} parent=1 // pred_check
      _
    $region7: #{langevin_forward.1} parent=1 // pred_check_branch
      %23 = sbr.rel (0) target = $region9
    $region8: #{langevin_forward.1} parent=1 // pred_region
      %25 = vsyncadd [#allocation3], 0
      %s26 = sshll.u32 %s1, 4
      %s27 = int_to_ptr.hbm [resolvable:$true] %s26
      %s28 = sshll.u32 [#allocation2], 4
      %s29 = int_to_ptr.vmem [resolvable:$true] %s28
      %34 = dma.hbm_to_vmem [thread:$0]  %s27, 512, %s29, [#allocation3], 128, 128, 8
    $region9: #{langevin_forward.1} parent=1 // pred_fallthru
      _
    // Predicated region
    $region10: #{langevin_forward.1} parent=1 // pred_check
      _
    $region11: #{langevin_forward.1} parent=1 // pred_check_branch
      %36 = sbr.rel (0) target = $region13
    $region12: #{langevin_forward.1} parent=1 // pred_region
      %38 = vsyncadd [#allocation6], 0
      %s39 = sshll.u32 %s2, 4
      %s40 = int_to_ptr.hbm [resolvable:$true] %s39
      %s41 = sshll.u32 [#allocation5], 4
      %s42 = int_to_ptr.vmem [resolvable:$true] %s41
      %47 = dma.hbm_to_vmem [thread:$0]  %s40, 2048, %s42, [#allocation6], 128, 128, 8
    $region13: #{langevin_forward.1} parent=1 // pred_fallthru
      _
    // Predicated region
    $region14: #{langevin_forward.1} parent=1 // pred_check
      _
    $region15: #{langevin_forward.1} parent=1 // pred_check_branch
      %49 = sbr.rel (0) target = $region17
    $region16: #{langevin_forward.1} parent=1 // pred_region
      _
    $region17: #{langevin_forward.1} parent=1 // pred_fallthru
      _
    // Predicated region
    $region18: #{langevin_forward.1} parent=1 // pred_check
      _
    $region19: #{langevin_forward.1} parent=1 // pred_check_branch
      %51 = sbr.rel (0) target = $region21
    $region20: #{langevin_forward.1} parent=1 // pred_region
      _
    $region21: #{langevin_forward.1} parent=1 // pred_fallthru
      _
    // Predicated region
    $region22: #{langevin_forward.1} parent=1 // pred_check
      _
    $region23: #{langevin_forward.1} parent=1 // pred_check_branch
      %53 = sbr.rel (0) target = $region25
    $region24: #{langevin_forward.1} parent=1 // pred_region
      %55 = vsyncadd [#allocation6], 0
      %s56 = sshll.u32 %s5, 4
      %s57 = int_to_ptr.hbm [resolvable:$true] %s56
      %s58 = sshll.u32 [#allocation7], 4
      %s59 = int_to_ptr.vmem [resolvable:$true] %s58
      %64 = dma.hbm_to_vmem [thread:$0]  %s57, 2048, %s59, [#allocation6], 512, 512, 32
    $region25: #{langevin_forward.1} parent=1 // pred_fallthru
      _
    // Predicated region
    $region26: #{langevin_forward.1} parent=1 // pred_check
      _
    $region27: #{langevin_forward.1} parent=1 // pred_check_branch
      %66 = sbr.rel (0) target = $region29
    $region28: #{langevin_forward.1} parent=1 // pred_region
      _
    $region29: #{langevin_forward.1} parent=1 // pred_fallthru
      _
    // Predicated region
    $region30: #{langevin_forward.1} parent=1 // pred_check
      _
    $region31: #{langevin_forward.1} parent=1 // pred_check_branch
      %68 = sbr.rel (0) target = $region33
    $region32: #{langevin_forward.1} parent=1 // pred_region
      %70 = dma.done [#allocation3], 512
    $region33: #{langevin_forward.1} parent=1 // pred_fallthru
      _
    // Predicated region
    $region34: #{langevin_forward.1} parent=1 // pred_check
      _
    $region35: #{langevin_forward.1} parent=1 // pred_check_branch
      %72 = sbr.rel (0) target = $region37
    $region36: #{langevin_forward.1} parent=1 // pred_region
      %74 = dma.done [#allocation6], 2048
    $region37: #{langevin_forward.1} parent=1 // pred_fallthru
      _
    // Predicated region
    $region38: #{langevin_forward.1} parent=1 // pred_check
      _
    $region39: #{langevin_forward.1} parent=1 // pred_check_branch
      %76 = sbr.rel (0) target = $region41
    $region40: #{langevin_forward.1} parent=1 // pred_region
      %78 = dma.done [#allocation6], 2048
    $region41: #{langevin_forward.1} parent=1 // pred_fallthru
      _
    %v80 = vld [vmem:[%s3] sm:$0x1]
    %v81 = vld [vmem:[%s0] sm:$0x3]
    %v82 = vld [vmem:[#allocation2] sm:$0xff]
    %v83 = vld [vmem:[#allocation2 + $0x8] sm:$0xff]
    %v84 = vld [vmem:[#allocation2 + $0x10] sm:$0xff]
    %v85 = vld [vmem:[#allocation2 + $0x18] sm:$0xff]
    %v86 = vld [vmem:[%s4] sm:$0x3]
    %v87 = vmul.f32 %v86, 0.1
    %v88 = vmul.f32 %v80, 0.005
    %v90 = vperm.slane %v88, 0
    %v92 = vsub.f32 %v87, %v90
    %v93 = vld [vmem:[#allocation5] sm:$0xff]
    %v94 = vld [vmem:[#allocation5 + $0x8] sm:$0xff]
    %v95 = vld [vmem:[#allocation5 + $0x10] sm:$0xff]
    %v96 = vld [vmem:[#allocation5 + $0x18] sm:$0xff]
    %vm97 = vcmask 261120
    %v99 = vsel %vm97, %v92, 0
    %101 = vmatpush.msra.mxu0 0.0
    %102 = vmatpush.msra.mxu0 0.0
    %103 = vmatpush.msra.mxu0 0.0
    %104 = vmatpush.msra.mxu0 0.0
    %105 = vmatpush.msra.mxu0 0.0
    %106 = vmatpush.msra.mxu0 0.0
    %107 = vmatpush.msra.mxu0 0.0
    %108 = vmatpush.msra.mxu0 0.0
    %109 = vmatpush.msra.mxu0 0.0
    %110 = vmatpush.msra.mxu0 0.0
    %111 = vmatpush.msra.mxu0 0.0
    %112 = vmatpush.msra.mxu0 0.0
    %113 = vmatpush.msra.mxu0 %v96
    %114 = vmatpush.msra.mxu0 %v95
    %115 = vmatpush.msra.mxu0 %v94
    %116 = vmatpush.msra.mxu0 %v93
    %117 = vmatmul.f32.gmra.mxu0 %v99
    %v118 = vpop.f32.mrf.mxu0
    %v119 = vadd.f32 0.0, %v118
    %120 = vdwg.mxu0
    %v122 = vsel %vm97, %v81, 0
    %124 = vmatpush.msra.mxu0 0.0
    %125 = vmatpush.msra.mxu0 0.0
    %126 = vmatpush.msra.mxu0 0.0
    %127 = vmatpush.msra.mxu0 0.0
    %128 = vmatpush.msra.mxu0 0.0
    %129 = vmatpush.msra.mxu0 0.0
    %130 = vmatpush.msra.mxu0 0.0
    %131 = vmatpush.msra.mxu0 0.0
    %132 = vmatpush.msra.mxu0 0.0
    %133 = vmatpush.msra.mxu0 0.0
    %134 = vmatpush.msra.mxu0 0.0
    %135 = vmatpush.msra.mxu0 0.0
    %136 = vmatpush.msra.mxu0 %v85
    %137 = vmatpush.msra.mxu0 %v84
    %138 = vmatpush.msra.mxu0 %v83
    %139 = vmatpush.msra.mxu0 %v82
    %140 = vmatmul.f32.gmra.mxu0 %v122
    %v141 = vpop.f32.mrf.mxu0
    %v142 = vadd.f32 %v119, %v141
    %143 = vdwg.mxu0
    %s144 = scalar_lea.vmem %s4, 2
    %v145 = vld [vmem:[%s144] sm:$0x3]
    %v146 = vmul.f32 %v145, 0.1
    %v147 = vsub.f32 %v146, %v90
    %s148 = scalar_lea.vmem [#allocation5], 32
    %v149 = vld [vmem:[%s148] sm:$0xff]
    %v150 = vld [vmem:[%s148 + $0x8] sm:$0xff]
    %v151 = vld [vmem:[%s148 + $0x10] sm:$0xff]
    %v152 = vld [vmem:[%s148 + $0x18] sm:$0xff]
    %v154 = vsel %vm97, %v147, 0
    %156 = vmatpush.msra.mxu0 0.0
    %157 = vmatpush.msra.mxu0 0.0
    %158 = vmatpush.msra.mxu0 0.0
    %159 = vmatpush.msra.mxu0 0.0
    %160 = vmatpush.msra.mxu0 0.0
    %161 = vmatpush.msra.mxu0 0.0
    %162 = vmatpush.msra.mxu0 0.0
    %163 = vmatpush.msra.mxu0 0.0
    %164 = vmatpush.msra.mxu0 0.0
    %165 = vmatpush.msra.mxu0 0.0
    %166 = vmatpush.msra.mxu0 0.0
    %167 = vmatpush.msra.mxu0 0.0
    %168 = vmatpush.msra.mxu0 %v152
    %169 = vmatpush.msra.mxu0 %v151
    %170 = vmatpush.msra.mxu0 %v150
    %171 = vmatpush.msra.mxu0 %v149
    %172 = vmatmul.f32.gmra.mxu0 %v154
    %v173 = vpop.f32.mrf.mxu0
    %v174 = vadd.f32 0.0, %v173
    %175 = vdwg.mxu0
    %v176 = vadd.f32 %v142, %v174
    %s177 = scalar_lea.vmem %s4, 4
    %v178 = vld [vmem:[%s177] sm:$0x3]
    %v179 = vmul.f32 %v178, 0.1
    %v180 = vsub.f32 %v179, %v90
    %s181 = scalar_lea.vmem [#allocation5], 64
    %v182 = vld [vmem:[%s181] sm:$0xff]
    %v183 = vld [vmem:[%s181 + $0x8] sm:$0xff]
    %v184 = vld [vmem:[%s181 + $0x10] sm:$0xff]
    %v185 = vld [vmem:[%s181 + $0x18] sm:$0xff]
    %v187 = vsel %vm97, %v180, 0
    %189 = vmatpush.msra.mxu0 0.0
    %190 = vmatpush.msra.mxu0 0.0
    %191 = vmatpush.msra.mxu0 0.0
    %192 = vmatpush.msra.mxu0 0.0
    %193 = vmatpush.msra.mxu0 0.0
    %194 = vmatpush.msra.mxu0 0.0
    %195 = vmatpush.msra.mxu0 0.0
    %196 = vmatpush.msra.mxu0 0.0
    %197 = vmatpush.msra.mxu0 0.0
    %198 = vmatpush.msra.mxu0 0.0
    %199 = vmatpush.msra.mxu0 0.0
    %200 = vmatpush.msra.mxu0 0.0
    %201 = vmatpush.msra.mxu0 %v185
    %202 = vmatpush.msra.mxu0 %v184
    %203 = vmatpush.msra.mxu0 %v183
    %204 = vmatpush.msra.mxu0 %v182
    %205 = vmatmul.f32.gmra.mxu0 %v187
    %v206 = vpop.f32.mrf.mxu0
    %v207 = vadd.f32 0.0, %v206
    %208 = vdwg.mxu0
    %v209 = vadd.f32 %v176, %v207
    %s210 = scalar_lea.vmem %s4, 6
    %v211 = vld [vmem:[%s210] sm:$0x3]
    %v212 = vmul.f32 %v211, 0.1
    %v213 = vsub.f32 %v212, %v90
    %s214 = scalar_lea.vmem [#allocation5], 96
    %v215 = vld [vmem:[%s214] sm:$0xff]
    %v216 = vld [vmem:[%s214 + $0x8] sm:$0xff]
    %v217 = vld [vmem:[%s214 + $0x10] sm:$0xff]
    %v218 = vld [vmem:[%s214 + $0x18] sm:$0xff]
    %v220 = vsel %vm97, %v213, 0
    %222 = vmatpush.msra.mxu0 0.0
    %223 = vmatpush.msra.mxu0 0.0
    %224 = vmatpush.msra.mxu0 0.0
    %225 = vmatpush.msra.mxu0 0.0
    %226 = vmatpush.msra.mxu0 0.0
    %227 = vmatpush.msra.mxu0 0.0
    %228 = vmatpush.msra.mxu0 0.0
    %229 = vmatpush.msra.mxu0 0.0
    %230 = vmatpush.msra.mxu0 0.0
    %231 = vmatpush.msra.mxu0 0.0
    %232 = vmatpush.msra.mxu0 0.0
    %233 = vmatpush.msra.mxu0 0.0
    %234 = vmatpush.msra.mxu0 %v218
    %235 = vmatpush.msra.mxu0 %v217
    %236 = vmatpush.msra.mxu0 %v216
    %237 = vmatpush.msra.mxu0 %v215
    %238 = vmatmul.f32.gmra.mxu0 %v220
    %v239 = vpop.f32.mrf.mxu0
    %v240 = vadd.f32 0.0, %v239
    %241 = vdwg.mxu0
    %v242 = vadd.f32 %v209, %v240
    %vm243 = vcmask 254976
    %244 = vst.msk [vmem:[#allocation8] sm:$0x3] %vm243, %v242
    %v245 = vpack.c.bf16 %v242, %v242
    %v246 = vld [vmem:[#allocation7] sm:$0xff]
    %v247 = vld [vmem:[#allocation7 + $0x8] sm:$0xff]
    %v248 = vld [vmem:[#allocation7 + $0x10] sm:$0xff]
    %v249 = vld [vmem:[#allocation7 + $0x18] sm:$0xff]
    %v250 = vld [vmem:[#allocation7 + $0x20] sm:$0xff]
    %v251 = vld [vmem:[#allocation7 + $0x28] sm:$0xff]
    %v252 = vld [vmem:[#allocation7 + $0x30] sm:$0xff]
    %v253 = vld [vmem:[#allocation7 + $0x38] sm:$0xff]
    %v254 = vld [vmem:[#allocation7 + $0x40] sm:$0xff]
    %v255 = vld [vmem:[#allocation7 + $0x48] sm:$0xff]
    %v256 = vld [vmem:[#allocation7 + $0x50] sm:$0xff]
    %v257 = vld [vmem:[#allocation7 + $0x58] sm:$0xff]
    %v258 = vld [vmem:[#allocation7 + $0x60] sm:$0xff]
    %v259 = vld [vmem:[#allocation7 + $0x68] sm:$0xff]
    %v260 = vld [vmem:[#allocation7 + $0x70] sm:$0xff]
    %v261 = vld [vmem:[#allocation7 + $0x78] sm:$0xff]
    %v262 = vld [vmem:[%s6] sm:$0xff]
    %v264 = vperm.slane %v262, 0
    %v265 = vperm.slane %v262, 1
    %v266 = vperm.slane %v262, 2
    %v267 = vperm.slane %v262, 3
    %v268 = vperm.slane %v262, 4
    %v269 = vperm.slane %v262, 5
    %v270 = vperm.slane %v262, 6
    %v271 = vperm.slane %v262, 7
    %v296 = vunpack.c.l.b16 %v246
    %v297 = vunpack.c.h.b16 %v246
    %v298 = vunpack.c.l.b16 %v247
    %v299 = vunpack.c.h.b16 %v247
    %v300 = vunpack.c.l.b16 %v248
    %v301 = vunpack.c.h.b16 %v248
    %v302 = vunpack.c.l.b16 %v249
    %v303 = vunpack.c.h.b16 %v249
    %v304 = vunpack.c.l.b16 %v250
    %v305 = vunpack.c.h.b16 %v250
    %v306 = vunpack.c.l.b16 %v251
    %v307 = vunpack.c.h.b16 %v251
    %v308 = vunpack.c.l.b16 %v252
    %v309 = vunpack.c.h.b16 %v252
    %v310 = vunpack.c.l.b16 %v253
    %v311 = vunpack.c.h.b16 %v253
    %v312 = vunpack.c.l.b16 %v254
    %v313 = vunpack.c.h.b16 %v254
    %v314 = vunpack.c.l.b16 %v255
    %v315 = vunpack.c.h.b16 %v255
    %v316 = vunpack.c.l.b16 %v256
    %v317 = vunpack.c.h.b16 %v256
    %v318 = vunpack.c.l.b16 %v257
    %v319 = vunpack.c.h.b16 %v257
    %v320 = vunpack.c.l.b16 %v258
    %v321 = vunpack.c.h.b16 %v258
    %v322 = vunpack.c.l.b16 %v259
    %v323 = vunpack.c.h.b16 %v259
    %v324 = vunpack.c.l.b16 %v260
    %v325 = vunpack.c.h.b16 %v260
    %v326 = vunpack.c.l.b16 %v261
    %v327 = vunpack.c.h.b16 %v261
    %v328 = vpack.c.b16 %v304, %v296
    %v329 = vpack.c.b16 %v305, %v297
    %v330 = vpack.c.b16 %v306, %v298
    %v331 = vpack.c.b16 %v307, %v299
    %v332 = vpack.c.b16 %v308, %v300
    %v333 = vpack.c.b16 %v309, %v301
    %v334 = vpack.c.b16 %v310, %v302
    %v335 = vpack.c.b16 %v311, %v303
    %v336 = vpack.c.b16 %v320, %v312
    %v337 = vpack.c.b16 %v321, %v313
    %v338 = vpack.c.b16 %v322, %v314
    %v339 = vpack.c.b16 %v323, %v315
    %v340 = vpack.c.b16 %v324, %v316
    %v341 = vpack.c.b16 %v325, %v317
    %v342 = vpack.c.b16 %v326, %v318
    %v343 = vpack.c.b16 %v327, %v319
    %v361 = vsel %vm97, %v245, 0
    %363 = vmatpush.bf16.msra.mxu0 0
    %364 = vmatpush.bf16.msra.mxu0 0
    %365 = vmatpush.bf16.msra.mxu0 0
    %366 = vmatpush.bf16.msra.mxu0 0
    %367 = vmatpush.bf16.msra.mxu0 0
    %368 = vmatpush.bf16.msra.mxu0 0
    %369 = vmatpush.bf16.msra.mxu0 %v336
    %370 = vmatpush.bf16.msra.mxu0 %v328
    %371 = vmatmul.bf16.gmra.mxu0 %v361
    %v372 = vpop.f32.mrf.mxu0
    %v373 = vadd.f32 %v264, %v372
    %v374 = vpop.f32.mrf.mxu0
    %375 = vdwg.mxu0
    %376 = vmatpush.bf16.msra.mxu0 0
    %377 = vmatpush.bf16.msra.mxu0 0
    %378 = vmatpush.bf16.msra.mxu0 0
    %379 = vmatpush.bf16.msra.mxu0 0
    %380 = vmatpush.bf16.msra.mxu0 0
    %381 = vmatpush.bf16.msra.mxu0 0
    %382 = vmatpush.bf16.msra.mxu0 %v337
    %383 = vmatpush.bf16.msra.mxu0 %v329
    %384 = vmatmul.bf16.gmra.mxu0 %v361
    %v385 = vpop.f32.mrf.mxu0
    %v386 = vadd.f32 %v265, %v385
    %v387 = vpop.f32.mrf.mxu0
    %388 = vdwg.mxu0
    %389 = vmatpush.bf16.msra.mxu0 0
    %390 = vmatpush.bf16.msra.mxu0 0
    %391 = vmatpush.bf16.msra.mxu0 0
    %392 = vmatpush.bf16.msra.mxu0 0
    %393 = vmatpush.bf16.msra.mxu0 0
    %394 = vmatpush.bf16.msra.mxu0 0
    %395 = vmatpush.bf16.msra.mxu0 %v338
    %396 = vmatpush.bf16.msra.mxu0 %v330
    %397 = vmatmul.bf16.gmra.mxu0 %v361
    %v398 = vpop.f32.mrf.mxu0
    %v399 = vadd.f32 %v266, %v398
    %v400 = vpop.f32.mrf.mxu0
    %401 = vdwg.mxu0
    %402 = vmatpush.bf16.msra.mxu0 0
    %403 = vmatpush.bf16.msra.mxu0 0
    %404 = vmatpush.bf16.msra.mxu0 0
    %405 = vmatpush.bf16.msra.mxu0 0
    %406 = vmatpush.bf16.msra.mxu0 0
    %407 = vmatpush.bf16.msra.mxu0 0
    %408 = vmatpush.bf16.msra.mxu0 %v339
    %409 = vmatpush.bf16.msra.mxu0 %v331
    %410 = vmatmul.bf16.gmra.mxu0 %v361
    %v411 = vpop.f32.mrf.mxu0
    %v412 = vadd.f32 %v267, %v411
    %v413 = vpop.f32.mrf.mxu0
    %414 = vdwg.mxu0
    %415 = vmatpush.bf16.msra.mxu0 0
    %416 = vmatpush.bf16.msra.mxu0 0
    %417 = vmatpush.bf16.msra.mxu0 0
    %418 = vmatpush.bf16.msra.mxu0 0
    %419 = vmatpush.bf16.msra.mxu0 0
    %420 = vmatpush.bf16.msra.mxu0 0
    %421 = vmatpush.bf16.msra.mxu0 %v340
    %422 = vmatpush.bf16.msra.mxu0 %v332
    %423 = vmatmul.bf16.gmra.mxu0 %v361
    %v424 = vpop.f32.mrf.mxu0
    %v425 = vadd.f32 %v268, %v424
    %v426 = vpop.f32.mrf.mxu0
    %427 = vdwg.mxu0
    %428 = vmatpush.bf16.msra.mxu0 0
    %429 = vmatpush.bf16.msra.mxu0 0
    %430 = vmatpush.bf16.msra.mxu0 0
    %431 = vmatpush.bf16.msra.mxu0 0
    %432 = vmatpush.bf16.msra.mxu0 0
    %433 = vmatpush.bf16.msra.mxu0 0
    %434 = vmatpush.bf16.msra.mxu0 %v341
    %435 = vmatpush.bf16.msra.mxu0 %v333
    %436 = vmatmul.bf16.gmra.mxu0 %v361
    %v437 = vpop.f32.mrf.mxu0
    %v438 = vadd.f32 %v269, %v437
    %v439 = vpop.f32.mrf.mxu0
    %440 = vdwg.mxu0
    %441 = vmatpush.bf16.msra.mxu0 0
    %442 = vmatpush.bf16.msra.mxu0 0
    %443 = vmatpush.bf16.msra.mxu0 0
    %444 = vmatpush.bf16.msra.mxu0 0
    %445 = vmatpush.bf16.msra.mxu0 0
    %446 = vmatpush.bf16.msra.mxu0 0
    %447 = vmatpush.bf16.msra.mxu0 %v342
    %448 = vmatpush.bf16.msra.mxu0 %v334
    %449 = vmatmul.bf16.gmra.mxu0 %v361
    %v450 = vpop.f32.mrf.mxu0
    %v451 = vadd.f32 %v270, %v450
    %v452 = vpop.f32.mrf.mxu0
    %453 = vdwg.mxu0
    %454 = vmatpush.bf16.msra.mxu0 0
    %455 = vmatpush.bf16.msra.mxu0 0
    %456 = vmatpush.bf16.msra.mxu0 0
    %457 = vmatpush.bf16.msra.mxu0 0
    %458 = vmatpush.bf16.msra.mxu0 0
    %459 = vmatpush.bf16.msra.mxu0 0
    %460 = vmatpush.bf16.msra.mxu0 %v343
    %461 = vmatpush.bf16.msra.mxu0 %v335
    %462 = vmatmul.bf16.gmra.mxu0 %v361
    %v463 = vpop.f32.mrf.mxu0
    %v464 = vadd.f32 %v271, %v463
    %v465 = vpop.f32.mrf.mxu0
    %466 = vdwg.mxu0
    %v475 = vrot.slane %v386, 6
    %v476 = vrot.slane %v399, 4
    %v477 = vrot.slane %v412, 2
    %v478 = vrot.slane %v438, 6
    %v479 = vrot.slane %v451, 4
    %v480 = vrot.slane %v464, 2
    %vm481 = vcmask 1041408
    %v482 = vsel %vm481, %v373, %v475
    %vm483 = vcmask 1045508
    %v484 = vsel %vm483, %v476, %v477
    %vm485 = vcmask 1043456
    %v486 = vsel %vm485, %v482, %v484
    %v487 = vsel %vm481, %v425, %v478
    %v488 = vsel %vm483, %v479, %v480
    %v489 = vsel %vm485, %v487, %v488
    %492 = vst [vmem:[%s8] sm:$0xff] %v486
    %493 = vst [vmem:[%s8 + $0x8] sm:$0xff] %v489
    %v494 = vmul.f32 %v373, %v373
    %v495 = vmul.f32 %v386, %v386
    %v496 = vmul.f32 %v399, %v399
    %v497 = vmul.f32 %v412, %v412
    %v498 = vmul.f32 %v425, %v425
    %v499 = vmul.f32 %v438, %v438
    %v500 = vmul.f32 %v451, %v451
    %v501 = vmul.f32 %v464, %v464
    %v502 = vsel %vm481, %v494, 0.0
    %v503 = vsel %vm481, %v495, 0.0
    %v504 = vadd.f32 %v502, %v503
    %v505 = vsel %vm481, %v496, 0.0
    %v506 = vadd.f32 %v504, %v505
    %v507 = vsel %vm481, %v497, 0.0
    %v508 = vadd.f32 %v506, %v507
    %v509 = vsel %vm481, %v498, 0.0
    %v510 = vadd.f32 %v508, %v509
    %v511 = vsel %vm481, %v499, 0.0
    %v512 = vadd.f32 %v510, %v511
    %v513 = vsel %vm481, %v500, 0.0
    %v514 = vadd.f32 %v512, %v513
    %v515 = vsel %vm481, %v501, 0.0
    %v516 = vadd.f32 %v514, %v515
    %517 = vadd.xlane.f32.xlu0 %v516
    %v518 = vpop.xlane.xlu0 %517
    %v519 = vrcp.pop 1024.0
    %v520 = vmul.f32 1024.0, %v519
    %v521 = vsub.f32 1.0, %v520
    %v522 = vmul.f32 %v519, %v521
    %v523 = vadd.f32 %v519, %v522
    %vm524 = vweird.f32 %v519
    %v525 = vsel %vm524, %v519, %v523
    %v526 = vmul.f32 %v518, %v525
    %v527 = vmul.f32 %v242, %v242
    %v528 = vsel %vm243, %v527, 0.0
    %529 = vadd.xlane.f32.xlu0 %v528
    %v530 = vpop.xlane.xlu0 %529
    %v531 = vrcp.pop 32.0
    %v532 = vmul.f32 32.0, %v531
    %v533 = vsub.f32 1.0, %v532
    %v534 = vmul.f32 %v531, %v533
    %v535 = vadd.f32 %v531, %v534
    %vm536 = vweird.f32 %v531
    %v537 = vsel %vm536, %v531, %v535
    %v538 = vmul.f32 %v530, %v537
    %vm539 = vcmask 1024
    %540 = vst.msk [vmem:[%s10] sm:$0x3] %vm539, %v526
    %541 = vst.msk [vmem:[%s11] sm:$0x3] %vm539, %v538
    %v542 = vmul.f32 %v538, 0.5
    %v543 = vadd.f32 %v526, %v542
    %544 = vst.msk [vmem:[%s9] sm:$0x3] %vm539, %v543
    // Predicated region
    $region42: #{langevin_forward.1} parent=1 // pred_check
      _
    $region43: #{langevin_forward.1} parent=1 // pred_check_branch
      %546 = sbr.rel (0) target = $region45
    $region44: #{langevin_forward.1} parent=1 // pred_region
      %548 = vsyncadd [#allocation4], 0
      %s550 = sshll.u32 [#allocation8], 4
      %s551 = int_to_ptr.vmem [resolvable:$true] %s550
      %s552 = sshll.u32 %s7, 4
      %s553 = int_to_ptr.hbm [resolvable:$true] %s552
      %555 = dma.vmem_to_hbm [thread:$0]  %s551, 32, %s553, [#allocation4]
    $region45: #{langevin_forward.1} parent=1 // pred_fallthru
      _
    // Predicated region
    $region46: #{langevin_forward.1} parent=1 // pred_check
      _
    $region47: #{langevin_forward.1} parent=1 // pred_check_branch
      %557 = sbr.rel (0) target = $region49
    $region48: #{langevin_forward.1} parent=1 // pred_region
      _
    $region49: #{langevin_forward.1} parent=1 // pred_fallthru
      _
    // Predicated region
    $region50: #{langevin_forward.1} parent=1 // pred_check
      _
    $region51: #{langevin_forward.1} parent=1 // pred_check_branch
      %559 = sbr.rel (0) target = $region53
    $region52: #{langevin_forward.1} parent=1 // pred_region
      _
    $region53: #{langevin_forward.1} parent=1 // pred_fallthru
      _
    // Predicated region
    $region54: #{langevin_forward.1} parent=1 // pred_check
      _
    $region55: #{langevin_forward.1} parent=1 // pred_check_branch
      %561 = sbr.rel (0) target = $region57
    $region56: #{langevin_forward.1} parent=1 // pred_region
      _
    $region57: #{langevin_forward.1} parent=1 // pred_fallthru
      _
    // Predicated region
    $region58: #{langevin_forward.1} parent=1 // pred_check
      _
    $region59: #{langevin_forward.1} parent=1 // pred_check_branch
      %563 = sbr.rel (0) target = $region61
    $region60: #{langevin_forward.1} parent=1 // pred_region
      _
    $region61: #{langevin_forward.1} parent=1 // pred_fallthru
      _
    // Predicated region
    $region62: #{langevin_forward.1} parent=1 // pred_check
      _
    $region63: #{langevin_forward.1} parent=1 // pred_check_branch
      %565 = sbr.rel (0) target = $region65
    $region64: #{langevin_forward.1} parent=1 // pred_region
      %567 = dma.done [#allocation4], 32
    $region65: #{langevin_forward.1} parent=1 // pred_fallthru
      _
    // Predicated region
    $region66: #{langevin_forward.1} parent=1 // pred_check
      _
    $region67: #{langevin_forward.1} parent=1 // pred_check_branch
      %569 = sbr.rel (0) target = $region69
    $region68: #{langevin_forward.1} parent=1 // pred_region
      _
    $region69: #{langevin_forward.1} parent=1 // pred_fallthru
      _
    // Predicated region
    $region70: #{langevin_forward.1} parent=1 // pred_check
      _
    $region71: #{langevin_forward.1} parent=1 // pred_check_branch
      %571 = sbr.rel (0) target = $region73
    $region72: #{langevin_forward.1} parent=1 // pred_region
      _
    $region73: #{langevin_forward.1} parent=1 // pred_fallthru
      _
    // Predicated region
    $region74: #{langevin_forward.1} parent=1 // pred_check
      _
    $region75: #{langevin_forward.1} parent=1 // pred_check_branch
      %573 = sbr.rel (0) target = $region77
    $region76: #{langevin_forward.1} parent=1 // pred_region
      _
    $region77: #{langevin_forward.1} parent=1 // pred_fallthru
      _
    // Predicated region
    $region78: #{langevin_forward.1} parent=1 // pred_check
      _
    $region79: #{langevin_forward.1} parent=1 // pred_check_branch
      %575 = sbr.rel (0) target = $region81
    $region80: #{langevin_forward.1} parent=1 // pred_region
      _
    $region81: #{langevin_forward.1} parent=1 // pred_fallthru
      _
    %576 = vsyncpa [#allocation3], 1
    %577 = vsyncpa [#allocation6], 1
    %578 = vsyncpa [#allocation4], 1

</llo_original>
